<compile_context>
chip_gen: v5e
topology: v5e:2x2
jax: 0.10.0
libtpu: 0.0.40
codegen_flags: <defaults>
</compile_context>

<pallas_src>
import jax
import jax.numpy as jnp
from jax import lax
from jax.experimental import pallas as pl
from jax.experimental.pallas import tpu as pltpu


def _round_up(x, m):
    return ((x + m - 1) // m) * m


def _proj_kernel(x_ref, w_ref, b_ref, o_ref):
    """One M-tile of the patch projection: out = x_tile @ W + b (f32 acc)."""
    o_ref[...] = (
        jnp.dot(x_ref[...], w_ref[...], preferred_element_type=jnp.float32)
        + b_ref[...]
    ).astype(o_ref.dtype)


def patch_proj_matmul(patches, weight, bias, *, tm=512, out_dtype=jnp.float32):
    """patches: (M, K) bf16, weight: (K, Np) bf16, bias: (1, Np) f32 -> (M, Np) f32.

    Np must be a multiple of 128 (padded by the caller). M is padded here to a
    multiple of the row tile tm; the caller slices the result back to M rows.
    Per-tile VMEM working set is ~2*tm*K*2B (double-buffered input) +
    K*Np*2B (resident weight) + 2*tm*Np*4B (output) — a few MiB for real ViT
    configs, comfortably inside v7x's 64 MiB / default 32 MiB scoped VMEM.
    """
    M, K = patches.shape
    _, Np = weight.shape
    assert Np % 128 == 0, f"Np={Np} must be a multiple of 128 (pad in caller)"

    # Don't over-pad tiny problems; keep tm a multiple of 8 (sublane granule).
    tm = min(tm, _round_up(M, 8))
    M_pad = _round_up(M, tm)
    if M_pad != M:
        patches = jnp.pad(patches, ((0, M_pad - M), (0, 0)))

    out = pl.pallas_call(
        _proj_kernel,
        out_shape=jax.ShapeDtypeStruct((M_pad, Np), out_dtype),
        grid_spec=pltpu.PrefetchScalarGridSpec(
            num_scalar_prefetch=0,
            grid=(M_pad // tm,),
            in_specs=[
                pl.BlockSpec((tm, K), lambda i: (i, 0)),   # M-tiled patches
                pl.BlockSpec((K, Np), lambda i: (0, 0)),   # weight: VMEM-resident
                pl.BlockSpec((1, Np), lambda i: (0, 0)),   # bias:   VMEM-resident
            ],
            out_specs=pl.BlockSpec((tm, Np), lambda i: (i, 0)),
        ),
        compiler_params=pltpu.CompilerParams(
            dimension_semantics=("parallel",),  # shard M tiles across TCs (v7x)
        ),
    )(patches, weight, bias)
    return out[:M]


def patch_embed_forward(x, conv_w, conv_b, patch_size, flatten=True, *, tm=512):
    """Equivalent of PatchEmbed.forward.

    x:      (B, C, H, W)            -- NCHW, like PyTorch
    conv_w: (embed_dim, C, ph, pw)  -- nn.Conv2d weight layout
    conv_b: (embed_dim,)
    returns (B, num_patches, embed_dim) if flatten else (B, embed_dim, Gh, Gw)
    """
    ph, pw = patch_size
    B, C, H, W = x.shape
    assert H % ph == 0 and W % pw == 0, "H/W must be divisible by patch size"
    Gh, Gw = H // ph, W // pw
    E = conv_w.shape[0]
    K = C * ph * pw
    M = B * Gh * Gw

    # --- glue: patch extraction (reshape/transpose, no compute) ---
    # Cast to bf16 before the transpose so the materialized HBM copy is
    # half-width; the MXU dot accumulates in f32 inside the kernel.
    # (An NHWC input layout would avoid this copy entirely, but NCHW keeps
    #  the PyTorch interface.)
    xb = x.astype(jnp.bfloat16)
    patches = xb.reshape(B, C, Gh, ph, Gw, pw)
    patches = jnp.transpose(patches, (0, 2, 4, 1, 3, 5))
    patches = patches.reshape(M, K)

    # Conv weight (E, C, ph, pw) -> (K, E); same (c, kh, kw) flatten order.
    # Pad the embed dim up to a multiple of 128 for lane-dense MXU/output.
    Np = _round_up(E, 128)
    w_mat = conv_w.reshape(E, K).T.astype(jnp.bfloat16)
    b_mat = conv_b.reshape(1, E).astype(jnp.float32)
    if Np != E:
        w_mat = jnp.pad(w_mat, ((0, 0), (0, Np - E)))
        b_mat = jnp.pad(b_mat, ((0, 0), (0, Np - E)))

    # --- Pallas hot path: M-tiled projection matmul + bias ---
    out = patch_proj_matmul(patches, w_mat, b_mat, tm=tm)[:, :E]  # (M, E) f32

    if flatten:
        return out.reshape(B, Gh * Gw, E)
    # matches PyTorch conv output layout (B, E, Gh, Gw) when flatten=False
    return jnp.transpose(out.reshape(B, Gh, Gw, E), (0, 3, 1, 2))


if __name__ == "__main__":
    # Small config consistent with the module: img 16x16, patch 8, C=4, E=32.
    B, C, H, W = 2, 4, 16, 16
    patch = (8, 8)
    E = 32

    key = jax.random.PRNGKey(0)
    kx, kw, kb = jax.random.split(key, 3)

    x = jax.random.normal(kx, (B, C, H, W), dtype=jnp.float32)
    # Deterministic synthetic Conv2d params (same shapes as nn.Conv2d).
    conv_w = jax.random.normal(kw, (E, C, patch[0], patch[1]), dtype=jnp.float32) * 0.02
    conv_b = jax.random.normal(kb, (E,), dtype=jnp.float32) * 0.02

    out = patch_embed_forward(x, conv_w, conv_b, patch, flatten=True)
    out = jax.block_until_ready(out)

    # Reference: strided conv (NCHW, f32) then flatten(2).transpose(1, 2).
    ref = lax.conv_general_dilated(
        x, conv_w,
        window_strides=patch, padding="VALID",
        dimension_numbers=("NCHW", "OIHW", "NCHW"),
    ) + conv_b.reshape(1, E, 1, 1)
    Gh, Gw = H // patch[0], W // patch[1]
    ref = jnp.transpose(ref.reshape(B, E, Gh * Gw), (0, 2, 1))

    assert out.shape == (B, Gh * Gw, E), out.shape
    # bf16 inputs (f32 accumulation) vs f32 reference -> slightly looser tol.
    assert jnp.allclose(out, ref, atol=2e-2, rtol=2e-2), (
        float(jnp.max(jnp.abs(out - ref)))
    )
    print("KERNEL_OK")
</pallas_src>

<mosaic_0001>
module attributes {stable_mosaic.version = 11 : i64} {
  func.func @_proj_kernel(%arg0: i32, %arg1: memref<8x256xbf16, #tpu.memory_space<vmem>>, %arg2: memref<256x128xbf16, #tpu.memory_space<vmem>>, %arg3: memref<1x128xf32, #tpu.memory_space<vmem>>, %arg4: memref<8x128xf32, #tpu.memory_space<vmem>>) attributes {dimension_semantics = [#tpu.dimension_semantics<parallel>], iteration_bounds = array<i64: 1>, scalar_prefetch = 0 : i64, scratch_operands = 0 : i64, tpu.core_type = #tpu.core_type<tc>, window_params = [{transform_indices = @transform_0, window_bounds = array<i64: 8, 256>}, {pipeline_mode = #tpu.pipeline_mode<synchronous>, transform_indices = @transform_1, window_bounds = array<i64: 256, 128>}, {pipeline_mode = #tpu.pipeline_mode<synchronous>, transform_indices = @transform_2, window_bounds = array<i64: 1, 128>}, {transform_indices = @transform_3, window_bounds = array<i64: 8, 128>}]} {
    %c0 = arith.constant 0 : index
    %c0_0 = arith.constant 0 : index
    %0 = vector.load %arg1[%c0, %c0_0] : memref<8x256xbf16, #tpu.memory_space<vmem>>, vector<8x256xbf16>
    %c0_1 = arith.constant 0 : index
    %c0_2 = arith.constant 0 : index
    %1 = vector.load %arg2[%c0_1, %c0_2] : memref<256x128xbf16, #tpu.memory_space<vmem>>, vector<256x128xbf16>
    %cst = arith.constant dense<0.000000e+00> : vector<8x128xf32>
    %2 = tpu.matmul %0, %1, %cst {dimension_numbers = #tpu.dot_dimension_numbers<[1], [0], [0], [1], [0, 0, 1, 1], [], []>} : vector<8x256xbf16>, vector<256x128xbf16>, vector<8x128xf32> -> vector<8x128xf32>
    %c0_3 = arith.constant 0 : index
    %c0_4 = arith.constant 0 : index
    %3 = vector.load %arg3[%c0_3, %c0_4] : memref<1x128xf32, #tpu.memory_space<vmem>>, vector<1x128xf32>
    %4 = vector.broadcast %3 : vector<1x128xf32> to vector<8x128xf32>
    %5 = arith.addf %2, %4 : vector<8x128xf32>
    %c0_5 = arith.constant 0 : index
    %c0_6 = arith.constant 0 : index
    %6 = vector.load %arg4[%c0_5, %c0_6] : memref<8x128xf32, #tpu.memory_space<vmem>>, vector<8x128xf32>
    tpu.vector_store %arg4[%c0_5, %c0_6], %5 {strides = array<i32>} : memref<8x128xf32, #tpu.memory_space<vmem>>, vector<8x128xf32>,
    return
  }
  func.func @transform_0(%arg0: i32) -> (i32, i32) {
    %c0_i32 = arith.constant 0 : i32
    %c0_i32_0 = arith.constant 0 : i32
    return %arg0, %c0_i32 : i32, i32
  }
  func.func @transform_1(%arg0: i32) -> (i32, i32) {
    %c0_i32 = arith.constant 0 : i32
    %c0_i32_0 = arith.constant 0 : i32
    %c0_i32_1 = arith.constant 0 : i32
    return %c0_i32, %c0_i32_0 : i32, i32
  }
  func.func @transform_2(%arg0: i32) -> (i32, i32) {
    %c0_i32 = arith.constant 0 : i32
    %c0_i32_0 = arith.constant 0 : i32
    %c0_i32_1 = arith.constant 0 : i32
    return %c0_i32, %c0_i32_0 : i32, i32
  }
  func.func @transform_3(%arg0: i32) -> (i32, i32) {
    %c0_i32 = arith.constant 0 : i32
    %c0_i32_0 = arith.constant 0 : i32
    return %arg0, %c0_i32 : i32, i32
  }
}

</mosaic_0001>

<llo_original>
// kernel: tpu_custom_call.1
$region0: #{tpu_custom_call.1}
  #allocation0 [shape = 'u32[]', space=smem, size = 0x4, offset = 0x4, fixed_abs, tag = 'smem constant byte address 0x4 - core index']
  #allocation1 [shape = 'u32[72,128]{1,0:T(1,128)}', space=vmem, size = 0x9000, scoped, tag = 'internal scratch']
  %s0 = inlined_call_operand.hbm [shape: bf16[8,256], index: 0, kind: input, shape index: {}]
  %s1 = inlined_call_operand.hbm [shape: bf16[256,128], index: 1, kind: input, shape index: {}]
  %s2 = inlined_call_operand.vmem [shape: f32[1,128], index: 2, kind: input, shape index: {}]
  %s3 = inlined_call_operand.hbm [shape: f32[8,128], index: 3, kind: output, shape index: {}]
  %s4 = sld [smem:[#allocation0]]
  $region30: #{tpu_custom_call.1} parent=0
    _
  %s6 = ssub.s32 1, %s4
  %s7 = scalar_select 0, %s6, %s4
  $region1: #{tpu_custom_call.1} parent=0
    #allocation2 [shape = 'u8[4096]{0}', space=vmem, size = 0x1000, scoped, tag = 'input window, operand 0, single buffered']
    #allocation3 [shape = 's32[1]{0}', space=sflag, size = 0x4, scoped, tag = 'scoped memory for tpu_custom_call.1']
    #allocation4 [shape = 's32[1]{0}', space=sflag, size = 0x4, scoped, tag = 'scoped memory for tpu_custom_call.1']
    #allocation5 [shape = 'u8[65536]{0}', space=vmem, size = 0x10000, scoped, tag = 'input window, operand 1, single buffered']
    #allocation6 [shape = 's32[1]{0}', space=sflag, size = 0x4, scoped, tag = 'scoped memory for tpu_custom_call.1']
    #allocation7 [shape = 'u8[4096]{0}', space=vmem, size = 0x1000, scoped, tag = 'output window, operand 0, single buffered']
    %8 = vsyncpa [#allocation3], 0
    %9 = vsyncpa [#allocation6], 0
    %10 = vsyncpa [#allocation4], 0
    // Predicated region
    $region2: #{tpu_custom_call.1} parent=1 // pred_check
      _
    $region3: #{tpu_custom_call.1} parent=1 // pred_check_branch
      %12 = sbr.rel (0) target = $region5
    $region4: #{tpu_custom_call.1} parent=1 // pred_region
      %14 = vsyncadd [#allocation3], 0
      %s16 = sshll.u32 %s0, 4
      %s17 = int_to_ptr.hbm [resolvable:$true] %s16
      %s18 = sshll.u32 [#allocation2], 4
      %s19 = int_to_ptr.vmem [resolvable:$true] %s18
      %21 = dma.hbm_to_vmem [thread:$0]  %s17, 128, %s19, [#allocation3]
    $region5: #{tpu_custom_call.1} parent=1 // pred_fallthru
      _
    // Predicated region
    $region6: #{tpu_custom_call.1} parent=1 // pred_check
      _
    $region7: #{tpu_custom_call.1} parent=1 // pred_check_branch
      %23 = sbr.rel (0) target = $region9
    $region8: #{tpu_custom_call.1} parent=1 // pred_region
      %25 = vsyncadd [#allocation6], 0
      %s26 = sshll.u32 %s1, 4
      %s27 = int_to_ptr.hbm [resolvable:$true] %s26
      %s28 = sshll.u32 [#allocation5], 4
      %s29 = int_to_ptr.vmem [resolvable:$true] %s28
      %34 = dma.hbm_to_vmem [thread:$0]  %s27, 2048, %s29, [#allocation6], 64, 64, 4
    $region9: #{tpu_custom_call.1} parent=1 // pred_fallthru
      _
    // Predicated region
    $region10: #{tpu_custom_call.1} parent=1 // pred_check
      _
    $region11: #{tpu_custom_call.1} parent=1 // pred_check_branch
      %36 = sbr.rel (0) target = $region13
    $region12: #{tpu_custom_call.1} parent=1 // pred_region
      _
    $region13: #{tpu_custom_call.1} parent=1 // pred_fallthru
      _
    // Predicated region
    $region14: #{tpu_custom_call.1} parent=1 // pred_check
      _
    $region15: #{tpu_custom_call.1} parent=1 // pred_check_branch
      %38 = sbr.rel (0) target = $region17
    $region16: #{tpu_custom_call.1} parent=1 // pred_region
      %40 = dma.done [#allocation3], 128
    $region17: #{tpu_custom_call.1} parent=1 // pred_fallthru
      _
    // Predicated region
    $region18: #{tpu_custom_call.1} parent=1 // pred_check
      _
    $region19: #{tpu_custom_call.1} parent=1 // pred_check_branch
      %42 = sbr.rel (0) target = $region21
    $region20: #{tpu_custom_call.1} parent=1 // pred_region
      %44 = dma.done [#allocation6], 2048
    $region21: #{tpu_custom_call.1} parent=1 // pred_fallthru
      _
    %v45 = vld [vmem:[#allocation2] sm:$0xff]
    %v46 = vld [vmem:[#allocation5] sm:$0xf]
    %v47 = vld [vmem:[#allocation5 + $0x4] sm:$0xf]
    %v48 = vld [vmem:[#allocation5 + $0x8] sm:$0xf]
    %v49 = vld [vmem:[#allocation5 + $0xc] sm:$0xf]
    %v50 = vld [vmem:[#allocation5 + $0x10] sm:$0xf]
    %v51 = vld [vmem:[#allocation5 + $0x14] sm:$0xf]
    %v52 = vld [vmem:[#allocation5 + $0x18] sm:$0xf]
    %v53 = vld [vmem:[#allocation5 + $0x1c] sm:$0xf]
    %v54 = vld [vmem:[#allocation5 + $0x20] sm:$0xf]
    %v55 = vld [vmem:[#allocation5 + $0x24] sm:$0xf]
    %v56 = vld [vmem:[#allocation5 + $0x28] sm:$0xf]
    %v57 = vld [vmem:[#allocation5 + $0x2c] sm:$0xf]
    %v58 = vld [vmem:[#allocation5 + $0x30] sm:$0xf]
    %v59 = vld [vmem:[#allocation5 + $0x34] sm:$0xf]
    %v60 = vld [vmem:[#allocation5 + $0x38] sm:$0xf]
    %v61 = vld [vmem:[#allocation5 + $0x3c] sm:$0xf]
    %v62 = vld [vmem:[#allocation5 + $0x40] sm:$0xf]
    %v63 = vld [vmem:[#allocation5 + $0x44] sm:$0xf]
    %v64 = vld [vmem:[#allocation5 + $0x48] sm:$0xf]
    %v65 = vld [vmem:[#allocation5 + $0x4c] sm:$0xf]
    %v66 = vld [vmem:[#allocation5 + $0x50] sm:$0xf]
    %v67 = vld [vmem:[#allocation5 + $0x54] sm:$0xf]
    %v68 = vld [vmem:[#allocation5 + $0x58] sm:$0xf]
    %v69 = vld [vmem:[#allocation5 + $0x5c] sm:$0xf]
    %v70 = vld [vmem:[#allocation5 + $0x60] sm:$0xf]
    %v71 = vld [vmem:[#allocation5 + $0x64] sm:$0xf]
    %v72 = vld [vmem:[#allocation5 + $0x68] sm:$0xf]
    %v73 = vld [vmem:[#allocation5 + $0x6c] sm:$0xf]
    %v74 = vld [vmem:[#allocation5 + $0x70] sm:$0xf]
    %v75 = vld [vmem:[#allocation5 + $0x74] sm:$0xf]
    %v76 = vld [vmem:[#allocation5 + $0x78] sm:$0xf]
    %v77 = vld [vmem:[#allocation5 + $0x7c] sm:$0xf]
    %v78 = vld [vmem:[%s2] sm:$0x1]
    %v80 = vperm.slane %v78, 0
    %v83 = vunpack.c.l.b16 %v45
    %v84 = vunpack.c.h.b16 %v45
    %v85 = vpack.c.b16 %v83, %v83
    %v86 = vpack.c.b16 %v84, %v84
    %v121 = vunpack.c.l.b16 %v46
    %v122 = vunpack.c.l.b16 %v47
    %v123 = vunpack.c.l.b16 %v48
    %v124 = vunpack.c.l.b16 %v49
    %v125 = vunpack.c.l.b16 %v50
    %v126 = vunpack.c.l.b16 %v51
    %v127 = vunpack.c.l.b16 %v52
    %v128 = vunpack.c.l.b16 %v53
    %v129 = vunpack.c.l.b16 %v54
    %v130 = vunpack.c.l.b16 %v55
    %v131 = vunpack.c.l.b16 %v56
    %v132 = vunpack.c.l.b16 %v57
    %v133 = vunpack.c.l.b16 %v58
    %v134 = vunpack.c.l.b16 %v59
    %v135 = vunpack.c.l.b16 %v60
    %v136 = vunpack.c.l.b16 %v61
    %v137 = vunpack.c.l.b16 %v62
    %v138 = vunpack.c.l.b16 %v63
    %v139 = vunpack.c.l.b16 %v64
    %v140 = vunpack.c.l.b16 %v65
    %v141 = vunpack.c.l.b16 %v66
    %v142 = vunpack.c.l.b16 %v67
    %v143 = vunpack.c.l.b16 %v68
    %v144 = vunpack.c.l.b16 %v69
    %v145 = vunpack.c.l.b16 %v70
    %v146 = vunpack.c.l.b16 %v71
    %v147 = vunpack.c.l.b16 %v72
    %v148 = vunpack.c.l.b16 %v73
    %v149 = vunpack.c.l.b16 %v74
    %v150 = vunpack.c.l.b16 %v75
    %v151 = vunpack.c.l.b16 %v76
    %v152 = vunpack.c.l.b16 %v77
    %v153 = vpack.c.b16 %v122, %v121
    %v154 = vpack.c.b16 %v124, %v123
    %v155 = vpack.c.b16 %v126, %v125
    %v156 = vpack.c.b16 %v128, %v127
    %v157 = vpack.c.b16 %v130, %v129
    %v158 = vpack.c.b16 %v132, %v131
    %v159 = vpack.c.b16 %v134, %v133
    %v160 = vpack.c.b16 %v136, %v135
    %v161 = vpack.c.b16 %v138, %v137
    %v162 = vpack.c.b16 %v140, %v139
    %v163 = vpack.c.b16 %v142, %v141
    %v164 = vpack.c.b16 %v144, %v143
    %v165 = vpack.c.b16 %v146, %v145
    %v166 = vpack.c.b16 %v148, %v147
    %v167 = vpack.c.b16 %v150, %v149
    %v168 = vpack.c.b16 %v152, %v151
    %185 = vmatpush.bf16.msra.mxu0 %v160
    %186 = vmatpush.bf16.msra.mxu0 %v159
    %187 = vmatpush.bf16.msra.mxu0 %v158
    %188 = vmatpush.bf16.msra.mxu0 %v157
    %189 = vmatpush.bf16.msra.mxu0 %v156
    %190 = vmatpush.bf16.msra.mxu0 %v155
    %191 = vmatpush.bf16.msra.mxu0 %v154
    %192 = vmatpush.bf16.msra.mxu0 %v153
    %193 = vmatmul.bf16.gmra.mxu0 %v85
    %v194 = vpop.f32.mrf.mxu0
    %v195 = vadd.f32 %v80, %v194
    %v196 = vpop.f32.mrf.mxu0
    %197 = vdwg.mxu0
    %198 = vmatpush.bf16.msra.mxu0 %v168
    %199 = vmatpush.bf16.msra.mxu0 %v167
    %200 = vmatpush.bf16.msra.mxu0 %v166
    %201 = vmatpush.bf16.msra.mxu0 %v165
    %202 = vmatpush.bf16.msra.mxu0 %v164
    %203 = vmatpush.bf16.msra.mxu0 %v163
    %204 = vmatpush.bf16.msra.mxu0 %v162
    %205 = vmatpush.bf16.msra.mxu0 %v161
    %206 = vmatmul.bf16.gmra.mxu0 %v86
    %v207 = vpop.f32.mrf.mxu0
    %v208 = vadd.f32 %v195, %v207
    %v209 = vpop.f32.mrf.mxu0
    %210 = vdwg.mxu0
    %211 = vst [vmem:[#allocation7] sm:$0xff] %v208
    // Predicated region
    $region22: #{tpu_custom_call.1} parent=1 // pred_check
      _
    $region23: #{tpu_custom_call.1} parent=1 // pred_check_branch
      %213 = sbr.rel (0) target = $region25
    $region24: #{tpu_custom_call.1} parent=1 // pred_region
      %215 = vsyncadd [#allocation4], 0
      %s217 = sshll.u32 [#allocation7], 4
      %s218 = int_to_ptr.vmem [resolvable:$true] %s217
      %s219 = sshll.u32 %s3, 4
      %s220 = int_to_ptr.hbm [resolvable:$true] %s219
      %222 = dma.vmem_to_hbm [thread:$0]  %s218, 128, %s220, [#allocation4]
    $region25: #{tpu_custom_call.1} parent=1 // pred_fallthru
      _
    // Predicated region
    $region26: #{tpu_custom_call.1} parent=1 // pred_check
      _
    $region27: #{tpu_custom_call.1} parent=1 // pred_check_branch
      %224 = sbr.rel (0) target = $region29
    $region28: #{tpu_custom_call.1} parent=1 // pred_region
      %226 = dma.done [#allocation4], 128
    $region29: #{tpu_custom_call.1} parent=1 // pred_fallthru
      _
    %227 = vsyncpa [#allocation3], 1
    %228 = vsyncpa [#allocation6], 1
    %229 = vsyncpa [#allocation4], 1

</llo_original>
